<compile_context>
chip_gen: v7x
topology: tpu7x:2x2x1
jax: 0.10.0
libtpu: 0.0.40
codegen_flags: <defaults>
</compile_context>

<pallas_src>
import functools

import jax
import jax.numpy as jnp
import numpy as np
from jax.experimental import pallas as pl
from jax.experimental.pallas import tpu as pltpu


def _leaky_relu(x, slope=0.1):
    return jnp.where(x > 0, x, slope * x)


def mlp_kernel(x_ref, w1_ref, b1_ref, w2_ref, b2_ref, w3_ref, b3_ref, o_ref):
    # One batch tile per grid step; weights/biases are resident full blocks.
    h = jnp.dot(x_ref[...], w1_ref[...], preferred_element_type=jnp.float32)
    h = _leaky_relu(h + b1_ref[...])

    h = jnp.dot(h.astype(w2_ref.dtype), w2_ref[...],
                preferred_element_type=jnp.float32)
    h = _leaky_relu(h + b2_ref[...])

    h = jnp.dot(h.astype(w3_ref.dtype), w3_ref[...],
                preferred_element_type=jnp.float32)
    h = h + b3_ref[...]
    o_ref[...] = h.astype(o_ref.dtype)


def _choose_batch_tile(b, feat, out_dim, itemsize):
    """Largest multiple-of-8 batch tile whose double-buffered x/out traffic
    stays comfortably under the 32 MiB default scoped-VMEM budget (also safe
    for v7x's 64 MiB physical VMEM)."""
    budget = 24 * 1024 * 1024                      # leave headroom for weights
    per_row = 2 * (feat + out_dim) * itemsize       # 2x double-buffered in+out
    tb = budget // max(per_row, 1)
    tb = int(max(8, min(1024, tb)))
    tb = (tb // 8) * 8
    b_pad8 = ((b + 7) // 8) * 8
    return b_pad8 if b_pad8 <= tb else tb


@functools.partial(jax.jit, static_argnames=("output_shape",))
def mlp_forward(x, params, output_shape):
    """x: shape (B, *input_shape). Returns (B, *output_shape)."""
    b = x.shape[0]
    x2d = x.reshape(b, -1)                          # no dtype upcast here
    feat = x2d.shape[1]

    w1, b1, w2, b2, w3, b3 = params
    h1, h2 = w1.shape[1], w2.shape[1]
    out_dim = w3.shape[1]
    out_dtype = x2d.dtype

    tb = _choose_batch_tile(b, feat, out_dim, x2d.dtype.itemsize)
    b_pad = ((b + tb - 1) // tb) * tb
    if b_pad != b:
        x2d = jnp.pad(x2d, ((0, b_pad - b), (0, 0)))
    num_tiles = b_pad // tb

    resident = lambda a: pl.BlockSpec(a.shape, lambda i: (0,) * a.ndim)

    flops = 2 * b_pad * (feat * h1 + h1 * h2 + h2 * out_dim)
    param_elems = (w1.size + b1.size + w2.size + b2.size + w3.size + b3.size)
    bytes_accessed = (b_pad * (feat + out_dim) * x2d.dtype.itemsize
                      + param_elems * w1.dtype.itemsize)

    out2d = pl.pallas_call(
        mlp_kernel,
        out_shape=jax.ShapeDtypeStruct((b_pad, out_dim), out_dtype),
        grid=(num_tiles,),
        in_specs=[
            pl.BlockSpec((tb, feat), lambda i: (i, 0)),   # x: batch-tiled
            resident(w1), resident(b1),
            resident(w2), resident(b2),
            resident(w3), resident(b3),
        ],
        out_specs=pl.BlockSpec((tb, out_dim), lambda i: (i, 0)),
        compiler_params=pltpu.CompilerParams(
            dimension_semantics=("parallel",)),
        cost_estimate=pl.CostEstimate(
            flops=flops, transcendentals=0, bytes_accessed=bytes_accessed),
    )(x2d, w1, b1, w2, b2, w3, b3)

    return out2d[:b].reshape(b, *output_shape)


def init_mlp_params(key, input_shape, output_shape, hiddens=(64, 64)):
    """Deterministic init mimicking nn.Linear's uniform(-1/sqrt(fan_in), ...)."""
    in_dim = int(np.prod(input_shape))
    out_dim = int(np.prod(output_shape))
    dims = [in_dim] + list(hiddens) + [out_dim]

    params = []
    for i in range(len(dims) - 1):
        fan_in, fan_out = dims[i], dims[i + 1]
        key, kw, kb = jax.random.split(key, 3)
        bound = 1.0 / np.sqrt(fan_in)
        # Stored (in, out) — transpose of PyTorch's (out, in) weight layout.
        w = jax.random.uniform(kw, (fan_in, fan_out), jnp.float32, -bound, bound)
        bvec = jax.random.uniform(kb, (1, fan_out), jnp.float32, -bound, bound)
        params.extend([w, bvec])
    return tuple(params)


if __name__ == "__main__":
    # Small shapes consistent with the module: image-like input, vector output.
    batch = 2
    input_shape = (4, 8, 8)      # flattens to 256 features
    output_shape = (2, 3)        # final linear produces 6 features
    hiddens = (32, 32)

    key = jax.random.PRNGKey(0)
    key, kx = jax.random.split(key)
    x = jax.random.normal(kx, (batch, *input_shape), jnp.float32)

    params = init_mlp_params(key, input_shape, output_shape, hiddens)

    out = mlp_forward(x, params, output_shape)
    out = jax.block_until_ready(out)

    # Reference check in plain JAX (same math, no Pallas).
    w1, b1, w2, b2, w3, b3 = params
    h = x.reshape(batch, -1)
    z1 = h @ w1 + b1
    h = jnp.where(z1 > 0, z1, 0.1 * z1)
    z2 = h @ w2 + b2
    h = jnp.where(z2 > 0, z2, 0.1 * z2)
    ref = (h @ w3 + b3).reshape(batch, *output_shape)
    np.testing.assert_allclose(np.asarray(out), np.asarray(ref),
                               rtol=1e-5, atol=1e-5)

    assert out.shape == (batch, *output_shape)
    print("KERNEL_OK")
</pallas_src>

<mosaic_0001>
module attributes {stable_mosaic.version = 11 : i64} {
  func.func @mlp_kernel(%arg0: i32, %arg1: memref<8x256xf32, #tpu.memory_space<vmem>>, %arg2: memref<256x32xf32, #tpu.memory_space<vmem>>, %arg3: memref<1x32xf32, #tpu.memory_space<vmem>>, %arg4: memref<32x32xf32, #tpu.memory_space<vmem>>, %arg5: memref<1x32xf32, #tpu.memory_space<vmem>>, %arg6: memref<32x6xf32, #tpu.memory_space<vmem>>, %arg7: memref<1x6xf32, #tpu.memory_space<vmem>>, %arg8: memref<8x6xf32, #tpu.memory_space<vmem>>) attributes {dimension_semantics = [#tpu.dimension_semantics<parallel>], iteration_bounds = array<i64: 1>, scalar_prefetch = 0 : i64, scratch_operands = 0 : i64, tpu.core_type = #tpu.core_type<tc>, window_params = [{transform_indices = @transform_0, window_bounds = array<i64: 8, 256>}, {pipeline_mode = #tpu.pipeline_mode<synchronous>, transform_indices = @transform_1, window_bounds = array<i64: 256, 32>}, {pipeline_mode = #tpu.pipeline_mode<synchronous>, transform_indices = @transform_2, window_bounds = array<i64: 1, 32>}, {pipeline_mode = #tpu.pipeline_mode<synchronous>, transform_indices = @transform_3, window_bounds = array<i64: 32, 32>}, {pipeline_mode = #tpu.pipeline_mode<synchronous>, transform_indices = @transform_4, window_bounds = array<i64: 1, 32>}, {pipeline_mode = #tpu.pipeline_mode<synchronous>, transform_indices = @transform_5, window_bounds = array<i64: 32, 6>}, {pipeline_mode = #tpu.pipeline_mode<synchronous>, transform_indices = @transform_6, window_bounds = array<i64: 1, 6>}, {transform_indices = @transform_7, window_bounds = array<i64: 8, 6>}]} {
    %c0 = arith.constant 0 : index
    %c0_0 = arith.constant 0 : index
    %0 = vector.load %arg1[%c0, %c0_0] : memref<8x256xf32, #tpu.memory_space<vmem>>, vector<8x256xf32>
    %c0_1 = arith.constant 0 : index
    %c0_2 = arith.constant 0 : index
    %1 = vector.load %arg2[%c0_1, %c0_2] : memref<256x32xf32, #tpu.memory_space<vmem>>, vector<256x32xf32>
    %cst = arith.constant dense<0.000000e+00> : vector<8x32xf32>
    %2 = tpu.matmul %0, %1, %cst {dimension_numbers = #tpu.dot_dimension_numbers<[1], [0], [0], [1], [0, 0, 1, 1], [], []>} : vector<8x256xf32>, vector<256x32xf32>, vector<8x32xf32> -> vector<8x32xf32>
    %c0_3 = arith.constant 0 : index
    %c0_4 = arith.constant 0 : index
    %3 = vector.load %arg3[%c0_3, %c0_4] : memref<1x32xf32, #tpu.memory_space<vmem>>, vector<1x32xf32>
    %4 = vector.broadcast %3 : vector<1x32xf32> to vector<8x32xf32>
    %5 = arith.addf %2, %4 : vector<8x32xf32>
    %cst_5 = arith.constant 0.000000e+00 : f32
    %6 = vector.broadcast %cst_5 : f32 to vector<8x32xf32>
    %7 = arith.cmpf ogt, %5, %6 : vector<8x32xf32>
    %cst_6 = arith.constant 1.000000e-01 : f32
    %8 = vector.broadcast %cst_6 : f32 to vector<8x32xf32>
    %9 = arith.mulf %8, %5 : vector<8x32xf32>
    %10 = arith.select %7, %5, %9 : vector<8x32xi1>, vector<8x32xf32>
    %c0_7 = arith.constant 0 : index
    %c0_8 = arith.constant 0 : index
    %11 = vector.load %arg4[%c0_7, %c0_8] : memref<32x32xf32, #tpu.memory_space<vmem>>, vector<32x32xf32>
    %cst_9 = arith.constant dense<0.000000e+00> : vector<8x32xf32>
    %12 = tpu.matmul %10, %11, %cst_9 {dimension_numbers = #tpu.dot_dimension_numbers<[1], [0], [0], [1], [0, 0, 1, 1], [], []>} : vector<8x32xf32>, vector<32x32xf32>, vector<8x32xf32> -> vector<8x32xf32>
    %c0_10 = arith.constant 0 : index
    %c0_11 = arith.constant 0 : index
    %13 = vector.load %arg5[%c0_10, %c0_11] : memref<1x32xf32, #tpu.memory_space<vmem>>, vector<1x32xf32>
    %14 = vector.broadcast %13 : vector<1x32xf32> to vector<8x32xf32>
    %15 = arith.addf %12, %14 : vector<8x32xf32>
    %cst_12 = arith.constant 0.000000e+00 : f32
    %16 = vector.broadcast %cst_12 : f32 to vector<8x32xf32>
    %17 = arith.cmpf ogt, %15, %16 : vector<8x32xf32>
    %cst_13 = arith.constant 1.000000e-01 : f32
    %18 = vector.broadcast %cst_13 : f32 to vector<8x32xf32>
    %19 = arith.mulf %18, %15 : vector<8x32xf32>
    %20 = arith.select %17, %15, %19 : vector<8x32xi1>, vector<8x32xf32>
    %c0_14 = arith.constant 0 : index
    %c0_15 = arith.constant 0 : index
    %21 = vector.load %arg6[%c0_14, %c0_15] : memref<32x6xf32, #tpu.memory_space<vmem>>, vector<32x6xf32>
    %cst_16 = arith.constant dense<0.000000e+00> : vector<8x6xf32>
    %22 = tpu.matmul %20, %21, %cst_16 {dimension_numbers = #tpu.dot_dimension_numbers<[1], [0], [0], [1], [0, 0, 1, 1], [], []>} : vector<8x32xf32>, vector<32x6xf32>, vector<8x6xf32> -> vector<8x6xf32>
    %c0_17 = arith.constant 0 : index
    %c0_18 = arith.constant 0 : index
    %23 = vector.load %arg7[%c0_17, %c0_18] : memref<1x6xf32, #tpu.memory_space<vmem>>, vector<1x6xf32>
    %24 = vector.broadcast %23 : vector<1x6xf32> to vector<8x6xf32>
    %25 = arith.addf %22, %24 : vector<8x6xf32>
    %c0_19 = arith.constant 0 : index
    %c0_20 = arith.constant 0 : index
    %26 = vector.load %arg8[%c0_19, %c0_20] : memref<8x6xf32, #tpu.memory_space<vmem>>, vector<8x6xf32>
    tpu.vector_store %arg8[%c0_19, %c0_20], %25 {strides = array<i32>} : memref<8x6xf32, #tpu.memory_space<vmem>>, vector<8x6xf32>,
    return
  }
  func.func @transform_0(%arg0: i32) -> (i32, i32) {
    %c0_i32 = arith.constant 0 : i32
    %c0_i32_0 = arith.constant 0 : i32
    return %arg0, %c0_i32 : i32, i32
  }
  func.func @transform_1(%arg0: i32) -> (i32, i32) {
    %c0_i32 = arith.constant 0 : i32
    %c0_i32_0 = arith.constant 0 : i32
    %c0_i32_1 = arith.constant 0 : i32
    return %c0_i32, %c0_i32_0 : i32, i32
  }
  func.func @transform_2(%arg0: i32) -> (i32, i32) {
    %c0_i32 = arith.constant 0 : i32
    %c0_i32_0 = arith.constant 0 : i32
    %c0_i32_1 = arith.constant 0 : i32
    return %c0_i32, %c0_i32_0 : i32, i32
  }
  func.func @transform_3(%arg0: i32) -> (i32, i32) {
    %c0_i32 = arith.constant 0 : i32
    %c0_i32_0 = arith.constant 0 : i32
    %c0_i32_1 = arith.constant 0 : i32
    return %c0_i32, %c0_i32_0 : i32, i32
  }
  func.func @transform_4(%arg0: i32) -> (i32, i32) {
    %c0_i32 = arith.constant 0 : i32
    %c0_i32_0 = arith.constant 0 : i32
    %c0_i32_1 = arith.constant 0 : i32
    return %c0_i32, %c0_i32_0 : i32, i32
  }
  func.func @transform_5(%arg0: i32) -> (i32, i32) {
    %c0_i32 = arith.constant 0 : i32
    %c0_i32_0 = arith.constant 0 : i32
    %c0_i32_1 = arith.constant 0 : i32
    return %c0_i32, %c0_i32_0 : i32, i32
  }
  func.func @transform_6(%arg0: i32) -> (i32, i32) {
    %c0_i32 = arith.constant 0 : i32
    %c0_i32_0 = arith.constant 0 : i32
    %c0_i32_1 = arith.constant 0 : i32
    return %c0_i32, %c0_i32_0 : i32, i32
  }
  func.func @transform_7(%arg0: i32) -> (i32, i32) {
    %c0_i32 = arith.constant 0 : i32
    %c0_i32_0 = arith.constant 0 : i32
    return %arg0, %c0_i32 : i32, i32
  }
}

</mosaic_0001>

<llo_original>
// kernel: mlp_forward.1
$region0: #{mlp_forward.1}
  #allocation0 [shape = 'u32[]', space=smem, size = 0x4, offset = 0x4, fixed_abs, tag = 'smem constant byte address 0x4 - core index']
  #allocation1 [shape = 'u32[144,128]{1,0:T(1,128)}', space=vmem, size = 0x12000, scoped, tag = 'internal scratch']
  %s0 = inlined_call_operand.vmem [shape: f32[8,256], index: 0, kind: input, shape index: {}]
  %s1 = inlined_call_operand.vmem [shape: f32[256,32], index: 1, kind: input, shape index: {}]
  %s2 = inlined_call_operand.vmem [shape: f32[1,32], index: 2, kind: input, shape index: {}]
  %s3 = inlined_call_operand.vmem [shape: f32[32,32], index: 3, kind: input, shape index: {}]
  %s4 = inlined_call_operand.vmem [shape: f32[1,32], index: 4, kind: input, shape index: {}]
  %s5 = inlined_call_operand.vmem [shape: f32[32,6], index: 5, kind: input, shape index: {}]
  %s6 = inlined_call_operand.vmem [shape: f32[1,6], index: 6, kind: input, shape index: {}]
  %s7 = inlined_call_operand.vmem [shape: f32[8,6], index: 7, kind: output, shape index: {}]
  %s8 = sld [smem:[#allocation0]]
  $region38: #{mlp_forward.1} parent=0
    _
  %s10 = ssub.s32 1, %s8
  %s11 = scalar_select 0, %s10, %s8
  // Predicated region
  $region2: #{mlp_forward.1} parent=0 // pred_check
    _
  $region3: #{mlp_forward.1} parent=0 // pred_check_branch
    %13 = sbr.rel (0) target = $region5
  $region4: #{mlp_forward.1} parent=0 // pred_region
    _
  $region5: #{mlp_forward.1} parent=0 // pred_fallthru
    _
  // Predicated region
  $region6: #{mlp_forward.1} parent=0 // pred_check
    _
  $region7: #{mlp_forward.1} parent=0 // pred_check_branch
    %15 = sbr.rel (0) target = $region9
  $region8: #{mlp_forward.1} parent=0 // pred_region
    _
  $region9: #{mlp_forward.1} parent=0 // pred_fallthru
    _
  // Predicated region
  $region10: #{mlp_forward.1} parent=0 // pred_check
    _
  $region11: #{mlp_forward.1} parent=0 // pred_check_branch
    %17 = sbr.rel (0) target = $region13
  $region12: #{mlp_forward.1} parent=0 // pred_region
    _
  $region13: #{mlp_forward.1} parent=0 // pred_fallthru
    _
  // Predicated region
  $region14: #{mlp_forward.1} parent=0 // pred_check
    _
  $region15: #{mlp_forward.1} parent=0 // pred_check_branch
    %19 = sbr.rel (0) target = $region17
  $region16: #{mlp_forward.1} parent=0 // pred_region
    _
  $region17: #{mlp_forward.1} parent=0 // pred_fallthru
    _
  // Predicated region
  $region18: #{mlp_forward.1} parent=0 // pred_check
    _
  $region19: #{mlp_forward.1} parent=0 // pred_check_branch
    %21 = sbr.rel (0) target = $region21
  $region20: #{mlp_forward.1} parent=0 // pred_region
    _
  $region21: #{mlp_forward.1} parent=0 // pred_fallthru
    _
  // Predicated region
  $region22: #{mlp_forward.1} parent=0 // pred_check
    _
  $region23: #{mlp_forward.1} parent=0 // pred_check_branch
    %23 = sbr.rel (0) target = $region25
  $region24: #{mlp_forward.1} parent=0 // pred_region
    _
  $region25: #{mlp_forward.1} parent=0 // pred_fallthru
    _
  // Predicated region
  $region26: #{mlp_forward.1} parent=0 // pred_check
    _
  $region27: #{mlp_forward.1} parent=0 // pred_check_branch
    %25 = sbr.rel (0) target = $region29
  $region28: #{mlp_forward.1} parent=0 // pred_region
    _
  $region29: #{mlp_forward.1} parent=0 // pred_fallthru
    _
  %v26 = vld [vmem:[%s0] sm:$0xff]
  %v27 = vld [vmem:[%s0 + $0x8] sm:$0xff]
  %v28 = vld [vmem:[%s1] sm:$0xff]
  %v29 = vld [vmem:[%s1 + $0x8] sm:$0xff]
  %v30 = vld [vmem:[%s1 + $0x10] sm:$0xff]
  %v31 = vld [vmem:[%s1 + $0x18] sm:$0xff]
  %v32 = vld [vmem:[%s1 + $0x20] sm:$0xff]
  %v33 = vld [vmem:[%s1 + $0x28] sm:$0xff]
  %v34 = vld [vmem:[%s1 + $0x30] sm:$0xff]
  %v35 = vld [vmem:[%s1 + $0x38] sm:$0xff]
  %v36 = vld [vmem:[%s1 + $0x40] sm:$0xff]
  %v37 = vld [vmem:[%s1 + $0x48] sm:$0xff]
  %v38 = vld [vmem:[%s1 + $0x50] sm:$0xff]
  %v39 = vld [vmem:[%s1 + $0x58] sm:$0xff]
  %v40 = vld [vmem:[%s1 + $0x60] sm:$0xff]
  %v41 = vld [vmem:[%s1 + $0x68] sm:$0xff]
  %v42 = vld [vmem:[%s1 + $0x70] sm:$0xff]
  %v43 = vld [vmem:[%s1 + $0x78] sm:$0xff]
  %v44 = vld [vmem:[%s1 + $0x80] sm:$0xff]
  %v45 = vld [vmem:[%s1 + $0x88] sm:$0xff]
  %v46 = vld [vmem:[%s1 + $0x90] sm:$0xff]
  %v47 = vld [vmem:[%s1 + $0x98] sm:$0xff]
  %v48 = vld [vmem:[%s1 + $0xa0] sm:$0xff]
  %v49 = vld [vmem:[%s1 + $0xa8] sm:$0xff]
  %v50 = vld [vmem:[%s1 + $0xb0] sm:$0xff]
  %v51 = vld [vmem:[%s1 + $0xb8] sm:$0xff]
  %v52 = vld [vmem:[%s1 + $0xc0] sm:$0xff]
  %v53 = vld [vmem:[%s1 + $0xc8] sm:$0xff]
  %v54 = vld [vmem:[%s1 + $0xd0] sm:$0xff]
  %v55 = vld [vmem:[%s1 + $0xd8] sm:$0xff]
  %v56 = vld [vmem:[%s1 + $0xe0] sm:$0xff]
  %v57 = vld [vmem:[%s1 + $0xe8] sm:$0xff]
  %v58 = vld [vmem:[%s1 + $0xf0] sm:$0xff]
  %v59 = vld [vmem:[%s1 + $0xf8] sm:$0xff]
  %v60 = vld [vmem:[%s2] sm:$0x1]
  %v62 = vlaneseq
  %v63 = vshrl.u32 %v62, 7
  %v64 = vsub.s32 0, %v63
  %v65 = vrot.slane %v60, %v64
  %67 = vmatprep.subr.mxu0 0.0
  %68 = vmatpush1.msra.mxu0 %v28
  %69 = vmatprep.subr.mxu0 0.0
  %70 = vmatpush1.msra.mxu0 %v29
  %71 = vmatprep.subr.mxu0 0.0
  %72 = vmatpush1.msra.mxu0 %v30
  %73 = vmatprep.subr.mxu0 0.0
  %74 = vmatpush1.msra.mxu0 %v31
  %75 = vmatprep.subr.mxu0 0.0
  %76 = vmatpush1.msra.mxu0 %v32
  %77 = vmatprep.subr.mxu0 0.0
  %78 = vmatpush1.msra.mxu0 %v33
  %79 = vmatprep.subr.mxu0 0.0
  %80 = vmatpush1.msra.mxu0 %v34
  %81 = vmatprep.subr.mxu0 0.0
  %82 = vmatpush1.msra.mxu0 %v35
  %83 = vmatprep.subr.mxu0 0.0
  %84 = vmatpush1.msra.mxu0 %v36
  %85 = vmatprep.subr.mxu0 0.0
  %86 = vmatpush1.msra.mxu0 %v37
  %87 = vmatprep.subr.mxu0 0.0
  %88 = vmatpush1.msra.mxu0 %v38
  %89 = vmatprep.subr.mxu0 0.0
  %90 = vmatpush1.msra.mxu0 %v39
  %91 = vmatprep.subr.mxu0 0.0
  %92 = vmatpush1.msra.mxu0 %v40
  %93 = vmatprep.subr.mxu0 0.0
  %94 = vmatpush1.msra.mxu0 %v41
  %95 = vmatprep.subr.mxu0 0.0
  %96 = vmatpush1.msra.mxu0 %v42
  %97 = vmatprep.subr.mxu0 0.0
  %98 = vmatpush1.msra.mxu0 %v43
  %99 = vmatprep.subr.mxu0 0.0
  %100 = vmatpush1.msra.mxu0 %v44
  %101 = vmatprep.subr.mxu0 0.0
  %102 = vmatpush1.msra.mxu0 %v45
  %103 = vmatprep.subr.mxu0 0.0
  %104 = vmatpush1.msra.mxu0 %v46
  %105 = vmatprep.subr.mxu0 0.0
  %106 = vmatpush1.msra.mxu0 %v47
  %107 = vmatprep.subr.mxu0 0.0
  %108 = vmatpush1.msra.mxu0 %v48
  %109 = vmatprep.subr.mxu0 0.0
  %110 = vmatpush1.msra.mxu0 %v49
  %111 = vmatprep.subr.mxu0 0.0
  %112 = vmatpush1.msra.mxu0 %v50
  %113 = vmatprep.subr.mxu0 0.0
  %114 = vmatpush1.msra.mxu0 %v51
  %115 = vmatprep.subr.mxu0 0.0
  %116 = vmatpush1.msra.mxu0 %v52
  %117 = vmatprep.subr.mxu0 0.0
  %118 = vmatpush1.msra.mxu0 %v53
  %119 = vmatprep.subr.mxu0 0.0
  %120 = vmatpush1.msra.mxu0 %v54
  %121 = vmatprep.subr.mxu0 0.0
  %122 = vmatpush1.msra.mxu0 %v55
  %123 = vmatprep.subr.mxu0 0.0
  %124 = vmatpush1.msra.mxu0 %v56
  %125 = vmatprep.subr.mxu0 0.0
  %126 = vmatpush1.msra.mxu0 %v57
  %127 = vmatprep.subr.mxu0 0.0
  %128 = vmatpush1.msra.mxu0 %v58
  %129 = vmatprep.subr.mxu0 0.0
  %130 = vmatpush1.msra.mxu0 %v59
  %131 = vmatprep.mubr.f32.mxu0 %v27
  %132 = vmatmul.mubr.f32.gmra.mrb[0].mxu0 %v26
  %v133 = vpop.f32.mrb[0].mxu0
  %v134 = vadd.f32 %v65, %v133
  %v135 = vpop.f32.mrb[0].mxu0
  %136 = vdwg.mxu0
  %vm137 = vcmp.gt.f32.partialorder %v134, 0.0
  %v138 = vmul.f32 %v134, 0.1
  %v139 = vsel %vm137, %v134, %v138
  %v140 = vld [vmem:[%s3] sm:$0xff]
  %v141 = vld [vmem:[%s3 + $0x8] sm:$0xff]
  %v142 = vld [vmem:[%s3 + $0x10] sm:$0xff]
  %v143 = vld [vmem:[%s3 + $0x18] sm:$0xff]
  %v144 = vld [vmem:[%s4] sm:$0x1]
  %v146 = vlaneseq
  %v147 = vshrl.u32 %v146, 7
  %v148 = vsub.s32 0, %v147
  %v149 = vrot.slane %v144, %v148
  %vm151 = vcmask 261120
  %v153 = vsel %vm151, %v139, 0
  %155 = vmatprep.subr.mxu0 0.0
  %156 = vmatpush1.msra.mxu0 %v140
  %157 = vmatprep.subr.mxu0 0.0
  %158 = vmatpush1.msra.mxu0 %v141
  %159 = vmatprep.subr.mxu0 0.0
  %160 = vmatpush1.msra.mxu0 %v142
  %161 = vmatprep.subr.mxu0 0.0
  %162 = vmatpush1.msra.mxu0 %v143
  %163 = vmatprep.subr.mxu0 0.0
  %164 = vmatpush1.msra.mxu0 0.0
  %165 = vmatprep.subr.mxu0 0.0
  %166 = vmatpush1.msra.mxu0 0.0
  %167 = vmatprep.subr.mxu0 0.0
  %168 = vmatpush1.msra.mxu0 0.0
  %169 = vmatprep.subr.mxu0 0.0
  %170 = vmatpush1.msra.mxu0 0.0
  %171 = vmatprep.subr.mxu0 0.0
  %172 = vmatpush1.msra.mxu0 0.0
  %173 = vmatprep.subr.mxu0 0.0
  %174 = vmatpush1.msra.mxu0 0.0
  %175 = vmatprep.subr.mxu0 0.0
  %176 = vmatpush1.msra.mxu0 0.0
  %177 = vmatprep.subr.mxu0 0.0
  %178 = vmatpush1.msra.mxu0 0.0
  %179 = vmatprep.subr.mxu0 0.0
  %180 = vmatpush1.msra.mxu0 0.0
  %181 = vmatprep.subr.mxu0 0.0
  %182 = vmatpush1.msra.mxu0 0.0
  %183 = vmatprep.subr.mxu0 0.0
  %184 = vmatpush1.msra.mxu0 0.0
  %185 = vmatprep.subr.mxu0 0.0
  %186 = vmatpush1.msra.mxu0 0.0
  %187 = vmatprep.subr.mxu0 0.0
  %188 = vmatpush1.msra.mxu0 0.0
  %189 = vmatprep.subr.mxu0 0.0
  %190 = vmatpush1.msra.mxu0 0.0
  %191 = vmatprep.subr.mxu0 0.0
  %192 = vmatpush1.msra.mxu0 0.0
  %193 = vmatprep.subr.mxu0 0.0
  %194 = vmatpush1.msra.mxu0 0.0
  %195 = vmatprep.subr.mxu0 0.0
  %196 = vmatpush1.msra.mxu0 0.0
  %197 = vmatprep.subr.mxu0 0.0
  %198 = vmatpush1.msra.mxu0 0.0
  %199 = vmatprep.subr.mxu0 0.0
  %200 = vmatpush1.msra.mxu0 0.0
  %201 = vmatprep.subr.mxu0 0.0
  %202 = vmatpush1.msra.mxu0 0.0
  %203 = vmatprep.subr.mxu0 0.0
  %204 = vmatpush1.msra.mxu0 0.0
  %205 = vmatprep.subr.mxu0 0.0
  %206 = vmatpush1.msra.mxu0 0.0
  %207 = vmatprep.subr.mxu0 0.0
  %208 = vmatpush1.msra.mxu0 0.0
  %209 = vmatprep.subr.mxu0 0.0
  %210 = vmatpush1.msra.mxu0 0.0
  %211 = vmatprep.subr.mxu0 0.0
  %212 = vmatpush1.msra.mxu0 0.0
  %213 = vmatprep.subr.mxu0 0.0
  %214 = vmatpush1.msra.mxu0 0.0
  %215 = vmatprep.subr.mxu0 0.0
  %216 = vmatpush1.msra.mxu0 0.0
  %217 = vmatprep.subr.mxu0 0.0
  %218 = vmatpush1.msra.mxu0 0.0
  %219 = vmatprep.mubr.f32.mxu0 0.0
  %220 = vmatmul.mubr.f32.gmra.mrb[0].mxu0 %v153
  %v221 = vpop.f32.mrb[0].mxu0
  %v222 = vadd.f32 %v149, %v221
  %v223 = vpop.f32.mrb[0].mxu0
  %224 = vdwg.mxu0
  %vm225 = vcmp.gt.f32.partialorder %v222, 0.0
  %v226 = vmul.f32 %v222, 0.1
  %v227 = vsel %vm225, %v222, %v226
  %v228 = vld [vmem:[%s5] sm:$0xff]
  %v229 = vld [vmem:[%s5 + $0x8] sm:$0xff]
  %v230 = vld [vmem:[%s5 + $0x10] sm:$0xff]
  %v231 = vld [vmem:[%s5 + $0x18] sm:$0xff]
  %v232 = vld [vmem:[%s6] sm:$0x1]
  %v234 = vlaneseq
  %v235 = vshrl.u32 %v234, 7
  %v236 = vsub.s32 0, %v235
  %v237 = vrot.slane %v232, %v236
  %v240 = vsel %vm151, %v227, 0
  %242 = vmatprep.subr.mxu0 0.0
  %243 = vmatpush1.msra.mxu0 %v228
  %244 = vmatprep.subr.mxu0 0.0
  %245 = vmatpush1.msra.mxu0 %v229
  %246 = vmatprep.subr.mxu0 0.0
  %247 = vmatpush1.msra.mxu0 %v230
  %248 = vmatprep.subr.mxu0 0.0
  %249 = vmatpush1.msra.mxu0 %v231
  %250 = vmatprep.subr.mxu0 0.0
  %251 = vmatpush1.msra.mxu0 0.0
  %252 = vmatprep.subr.mxu0 0.0
  %253 = vmatpush1.msra.mxu0 0.0
  %254 = vmatprep.subr.mxu0 0.0
  %255 = vmatpush1.msra.mxu0 0.0
  %256 = vmatprep.subr.mxu0 0.0
  %257 = vmatpush1.msra.mxu0 0.0
  %258 = vmatprep.subr.mxu0 0.0
  %259 = vmatpush1.msra.mxu0 0.0
  %260 = vmatprep.subr.mxu0 0.0
  %261 = vmatpush1.msra.mxu0 0.0
  %262 = vmatprep.subr.mxu0 0.0
  %263 = vmatpush1.msra.mxu0 0.0
  %264 = vmatprep.subr.mxu0 0.0
  %265 = vmatpush1.msra.mxu0 0.0
  %266 = vmatprep.subr.mxu0 0.0
  %267 = vmatpush1.msra.mxu0 0.0
  %268 = vmatprep.subr.mxu0 0.0
  %269 = vmatpush1.msra.mxu0 0.0
  %270 = vmatprep.subr.mxu0 0.0
  %271 = vmatpush1.msra.mxu0 0.0
  %272 = vmatprep.subr.mxu0 0.0
  %273 = vmatpush1.msra.mxu0 0.0
  %274 = vmatprep.subr.mxu0 0.0
  %275 = vmatpush1.msra.mxu0 0.0
  %276 = vmatprep.subr.mxu0 0.0
  %277 = vmatpush1.msra.mxu0 0.0
  %278 = vmatprep.subr.mxu0 0.0
  %279 = vmatpush1.msra.mxu0 0.0
  %280 = vmatprep.subr.mxu0 0.0
  %281 = vmatpush1.msra.mxu0 0.0
  %282 = vmatprep.subr.mxu0 0.0
  %283 = vmatpush1.msra.mxu0 0.0
  %284 = vmatprep.subr.mxu0 0.0
  %285 = vmatpush1.msra.mxu0 0.0
  %286 = vmatprep.subr.mxu0 0.0
  %287 = vmatpush1.msra.mxu0 0.0
  %288 = vmatprep.subr.mxu0 0.0
  %289 = vmatpush1.msra.mxu0 0.0
  %290 = vmatprep.subr.mxu0 0.0
  %291 = vmatpush1.msra.mxu0 0.0
  %292 = vmatprep.subr.mxu0 0.0
  %293 = vmatpush1.msra.mxu0 0.0
  %294 = vmatprep.subr.mxu0 0.0
  %295 = vmatpush1.msra.mxu0 0.0
  %296 = vmatprep.subr.mxu0 0.0
  %297 = vmatpush1.msra.mxu0 0.0
  %298 = vmatprep.subr.mxu0 0.0
  %299 = vmatpush1.msra.mxu0 0.0
  %300 = vmatprep.subr.mxu0 0.0
  %301 = vmatpush1.msra.mxu0 0.0
  %302 = vmatprep.subr.mxu0 0.0
  %303 = vmatpush1.msra.mxu0 0.0
  %304 = vmatprep.subr.mxu0 0.0
  %305 = vmatpush1.msra.mxu0 0.0
  %306 = vmatprep.mubr.f32.mxu0 0.0
  %307 = vmatmul.mubr.f32.gmra.mrb[0].mxu0 %v240
  %v308 = vpop.f32.mrb[0].mxu0
  %v309 = vadd.f32 %v237, %v308
  %v310 = vpop.f32.mrb[0].mxu0
  %311 = vdwg.mxu0
  %vm312 = vcmask 48128
  %313 = vst.msk [vmem:[%s7] sm:$0xff] %vm312, %v309
  // Predicated region
  $region30: #{mlp_forward.1} parent=0 // pred_check
    _
  $region31: #{mlp_forward.1} parent=0 // pred_check_branch
    %315 = sbr.rel (0) target = $region33
  $region32: #{mlp_forward.1} parent=0 // pred_region
    _
  $region33: #{mlp_forward.1} parent=0 // pred_fallthru
    _
  // Predicated region
  $region34: #{mlp_forward.1} parent=0 // pred_check
    _
  $region35: #{mlp_forward.1} parent=0 // pred_check_branch
    %317 = sbr.rel (0) target = $region37
  $region36: #{mlp_forward.1} parent=0 // pred_region
    _
  $region37: #{mlp_forward.1} parent=0 // pred_fallthru
    _

</llo_original>
